<compile_context>
chip_gen: v6e
topology: v6e:2x2x1
jax: 0.10.0
libtpu: 0.0.40
codegen_flags: <defaults>
</compile_context>

<pallas_src>
import functools

import jax
import jax.numpy as jnp
from jax.experimental import pallas as pl
from jax.experimental.pallas import tpu as pltpu


def _loss_kernel(x_ref, w1_ref, b1_ref, w2_ref, b2_ref, out_ref,
                 *, tm, class_num, n_rows, rd, rg, mm_dtype):
    i = pl.program_id(0)
    rd_f = jnp.float32(rd)
    rg_f = jnp.float32(rg)

    # --- fc1 in transposed form: h_t = W1 @ x^T  (rows of the tile on lanes).
    x = x_ref[...].astype(mm_dtype)                           # (tm, E)
    h_t = jax.lax.dot_general(                                # (H, tm) f32
        w1_ref[...], x,
        dimension_numbers=(((1,), (1,)), ((), ())),           # contract on E
        preferred_element_type=jnp.float32)
    h_t = jnp.maximum(h_t + b1_ref[...], 0.0)                 # (H,1) bias bcast

    # --- fc2: logits_t = W2 @ h_t -> (C, tm), lane-dense.
    logits_t = (jnp.dot(w2_ref[...], h_t.astype(mm_dtype),
                        preferred_element_type=jnp.float32)
                + b2_ref[...])                                # (C, tm) f32

    # Global row index per lane; validity mask for the ragged last tile.
    lane = jax.lax.broadcasted_iota(jnp.int32, (1, tm), 1)
    row = i * tm + lane                                       # (1, tm)
    valid = row < n_rows                                      # (1, tm) bool
    # Sanitise garbage rows *before* exp/log (0 * NaN would still be NaN).
    logits_t = jnp.where(valid, logits_t, 0.0)

    # Per-class views (static sublane slices); unrolled, class_num is tiny.
    cls_logits = [logits_t[c:c + 1, :] for c in range(class_num)]  # (1, tm)

    # Numerically stable log-sum-exp over the (tiny) class axis.
    m = cls_logits[0]
    for lc in cls_logits[1:]:
        m = jnp.maximum(m, lc)
    s = jnp.zeros_like(m)
    for lc in cls_logits:
        s = s + jnp.exp(lc - m)
    lse = m + jnp.log(s)                                      # (1, tm)

    # Fused real / fake one-hot selection.
    label = row % class_num
    fake = (row + 1) % class_num
    weighted = jnp.zeros_like(m)
    for c, lc in enumerate(cls_logits):
        sel = (rd_f * (label == c).astype(jnp.float32)
               + rg_f * (fake == c).astype(jnp.float32))
        weighted = weighted + sel * lc                        # (1, tm)

    # Partial sum of rd*CE_label + rg*CE_fake over the valid rows of this tile.
    partial = jnp.sum(jnp.where(valid, (rd_f + rg_f) * lse - weighted, 0.0))

    # Lane-dense (1, 8, 128) partial-sum slab; the wrapper reads [:, 0, 0].
    out_ref[...] = jnp.full(out_ref.shape, partial, dtype=jnp.float32)


def _round_up(a, b):
    return (a + b - 1) // b * b


def batch_seq_discriminator_loss(x, w1, b1, w2, b2,
                                 loss_discriminator_ratio=1.0,
                                 loss_generator_ratio=1.0,
                                 tm=4096,
                                 matmul_dtype=jnp.bfloat16):
    """x: (B, S, C, E).  Weights in PyTorch nn.Linear layout:
    w1: (H, E), b1: (H,), w2: (C, H), b2: (C,)."""
    B, S, C, E = x.shape
    H = w1.shape[0]
    N = B * S * C

    x_itemsize = jnp.dtype(x.dtype).itemsize
    mm_itemsize = jnp.dtype(matmul_dtype).itemsize

    # --- row-tile selection --------------------------------------------------
    tm = max(8, min(_round_up(int(tm), 128), _round_up(N, 8)))
    # v7x megacore: make sure both TensorCores get tiles when there is work
    # (aim for >= 4 tiles once N is non-trivial).
    if N >= 1024:
        tm = min(tm, max(128, _round_up(pl.cdiv(N, 4), 128)))

    # Generation-aware VMEM budget (v5e/v6e: 128 MiB, v7x: 64 MiB per core).
    try:
        vmem_cap = int(getattr(pltpu.get_tpu_info(), "vmem_capacity_bytes",
                               64 * 1024 * 1024))
    except Exception:
        vmem_cap = 64 * 1024 * 1024

    def _vmem_bytes(t):
        return (2 * t * E * x_itemsize                       # double-buffered x tiles
                + 2 * (H * E + C * H) * mm_itemsize          # resident params
                + 2 * (H + C) * 4                            # biases
                + t * (H + C + 8) * 4                        # h_t / logits_t / row temps
                + 2 * 8 * 128 * 4)                           # output slab

    budget = int(vmem_cap * 0.6)
    while _vmem_bytes(tm) > budget and tm > 128:
        tm = _round_up(max(128, tm // 2), 128)
    vmem_limit = int(min(max(4 * _vmem_bytes(tm), 16 * 1024 * 1024),
                         vmem_cap * 3 // 4))

    n_tiles = pl.cdiv(N, tm)

    # No cast / pad pre-pass over x: it is streamed in its stored dtype and the
    # ragged last tile is masked inside the kernel.
    x_flat = x.reshape(N, E)
    w1c = w1.astype(matmul_dtype)                  # (H, E)
    w2c = w2.astype(matmul_dtype)                  # (C, H)
    b1c = b1.reshape(H, 1).astype(jnp.float32)
    b2c = b2.reshape(C, 1).astype(jnp.float32)

    kernel = functools.partial(
        _loss_kernel, tm=tm, class_num=C, n_rows=N,
        rd=float(loss_discriminator_ratio), rg=float(loss_generator_ratio),
        mm_dtype=matmul_dtype)

    partials = pl.pallas_call(
        kernel,
        out_shape=jax.ShapeDtypeStruct((n_tiles, 8, 128), jnp.float32),
        grid_spec=pltpu.PrefetchScalarGridSpec(
            num_scalar_prefetch=0,
            grid=(n_tiles,),
            in_specs=[
                pl.BlockSpec((tm, E), lambda i: (i, 0)),   # streamed x row tile
                pl.BlockSpec((H, E), lambda i: (0, 0)),    # W1 (resident)
                pl.BlockSpec((H, 1), lambda i: (0, 0)),    # b1
                pl.BlockSpec((C, H), lambda i: (0, 0)),    # W2 (resident)
                pl.BlockSpec((C, 1), lambda i: (0, 0)),    # b2
            ],
            out_specs=pl.BlockSpec((1, 8, 128), lambda i: (i, 0, 0)),
        ),
        compiler_params=pltpu.CompilerParams(
            dimension_semantics=("parallel",),
            vmem_limit_bytes=vmem_limit),
    )(x_flat, w1c, b1c, w2c, b2c)

    # Tiny final reduction + mean outside the kernel (f32, no serial bottleneck).
    return jnp.sum(partials[:, 0, 0]) / jnp.float32(N)


def _reference(x, w1, b1, w2, b2, rd=1.0, rg=1.0):
    B, S, C, E = x.shape
    N = B * S * C
    xf = x.reshape(N, E)
    logits = jnp.maximum(xf @ w1.T + b1, 0.0) @ w2.T + b2
    label = jnp.arange(N) % C
    fake = (label + 1) % C
    logp = jax.nn.log_softmax(logits, axis=-1)
    ce_l = -jnp.mean(jnp.take_along_axis(logp, label[:, None], axis=1))
    ce_f = -jnp.mean(jnp.take_along_axis(logp, fake[:, None], axis=1))
    return rd * ce_l + rg * ce_f


if __name__ == "__main__":
    # Small shapes consistent with the module's forward:
    # (batch=2, seq=8, class_num=2, embedding_dim=32), hidden_size=32.
    B, S, C, E, H = 2, 8, 2, 32, 32

    key = jax.random.PRNGKey(0)
    kx, kw1, kb1, kw2, kb2 = jax.random.split(key, 5)

    x = jax.random.normal(kx, (B, S, C, E), dtype=jnp.float32)
    # PyTorch Linear layout: weight (out, in), bias (out,).
    w1 = jax.random.normal(kw1, (H, E), dtype=jnp.float32) * 0.1
    b1 = jax.random.normal(kb1, (H,), dtype=jnp.float32) * 0.1
    w2 = jax.random.normal(kw2, (C, H), dtype=jnp.float32) * 0.1
    b2 = jax.random.normal(kb2, (C,), dtype=jnp.float32) * 0.1

    ref = _reference(x, w1, b1, w2, b2, rd=1.0, rg=1.0)

    # Exact float32 path: must match the f32 reference tightly.
    loss_f32 = batch_seq_discriminator_loss(
        x, w1, b1, w2, b2,
        loss_discriminator_ratio=1.0, loss_generator_ratio=1.0,
        matmul_dtype=jnp.float32)
    loss_f32 = jax.block_until_ready(loss_f32)
    assert jnp.allclose(loss_f32, ref, rtol=1e-5, atol=1e-5), (loss_f32, ref)

    # Default (bf16-streamed) path: looser tolerance since input precision changes.
    loss_bf16 = batch_seq_discriminator_loss(
        x, w1, b1, w2, b2,
        loss_discriminator_ratio=1.0, loss_generator_ratio=1.0)
    loss_bf16 = jax.block_until_ready(loss_bf16)
    assert jnp.allclose(loss_bf16, ref, rtol=2e-2, atol=2e-2), (loss_bf16, ref)

    # Ragged tile (N=30 not a multiple of the tile): exercises the in-kernel
    # validity mask / logit sanitisation that replaced the HBM zero-padding.
    xr = jax.random.normal(kx, (3, 5, C, E), dtype=jnp.float32)
    ref_r = _reference(xr, w1, b1, w2, b2, rd=0.7, rg=1.3)
    loss_r = batch_seq_discriminator_loss(
        xr, w1, b1, w2, b2,
        loss_discriminator_ratio=0.7, loss_generator_ratio=1.3,
        matmul_dtype=jnp.float32)
    loss_r = jax.block_until_ready(loss_r)
    assert jnp.allclose(loss_r, ref_r, rtol=1e-5, atol=1e-5), (loss_r, ref_r)

    print("KERNEL_OK")
</pallas_src>

<mosaic_0001>
module attributes {stable_mosaic.version = 11 : i64} {
  func.func @_loss_kernel(%arg0: i32, %arg1: memref<32x32xf32, #tpu.memory_space<vmem>>, %arg2: memref<32x32xf32, #tpu.memory_space<vmem>>, %arg3: memref<32x1xf32, #tpu.memory_space<vmem>>, %arg4: memref<2x32xf32, #tpu.memory_space<vmem>>, %arg5: memref<2x1xf32, #tpu.memory_space<vmem>>, %arg6: memref<1x8x128xf32, #tpu.memory_space<vmem>>) attributes {dimension_semantics = [#tpu.dimension_semantics<parallel>], iteration_bounds = array<i64: 1>, scalar_prefetch = 0 : i64, scratch_operands = 0 : i64, tpu.core_type = #tpu.core_type<tc>, window_params = [{transform_indices = @transform_0, window_bounds = array<i64: 32, 32>}, {pipeline_mode = #tpu.pipeline_mode<synchronous>, transform_indices = @transform_1, window_bounds = array<i64: 32, 32>}, {pipeline_mode = #tpu.pipeline_mode<synchronous>, transform_indices = @transform_2, window_bounds = array<i64: 32, 1>}, {pipeline_mode = #tpu.pipeline_mode<synchronous>, transform_indices = @transform_3, window_bounds = array<i64: 2, 32>}, {pipeline_mode = #tpu.pipeline_mode<synchronous>, transform_indices = @transform_4, window_bounds = array<i64: 2, 1>}, {transform_indices = @transform_5, window_bounds = array<i64: 1, 8, 128>}]} {
    %c0 = arith.constant 0 : index
    %c0_0 = arith.constant 0 : index
    %0 = vector.load %arg1[%c0, %c0_0] : memref<32x32xf32, #tpu.memory_space<vmem>>, vector<32x32xf32>
    %c0_1 = arith.constant 0 : index
    %c0_2 = arith.constant 0 : index
    %1 = vector.load %arg2[%c0_1, %c0_2] : memref<32x32xf32, #tpu.memory_space<vmem>>, vector<32x32xf32>
    %cst = arith.constant dense<0.000000e+00> : vector<32x32xf32>
    %2 = tpu.matmul %1, %0, %cst {dimension_numbers = #tpu.dot_dimension_numbers<[1], [1], [0], [0], [0, 0, 1, 0], [], []>} : vector<32x32xf32>, vector<32x32xf32>, vector<32x32xf32> -> vector<32x32xf32>
    %c0_3 = arith.constant 0 : index
    %c0_4 = arith.constant 0 : index
    %3 = vector.load %arg3[%c0_3, %c0_4] : memref<32x1xf32, #tpu.memory_space<vmem>>, vector<32x1xf32>
    %4 = vector.broadcast %3 : vector<32x1xf32> to vector<32x32xf32>
    %5 = arith.addf %2, %4 : vector<32x32xf32>
    %cst_5 = arith.constant 0.000000e+00 : f32
    %6 = vector.broadcast %cst_5 : f32 to vector<32x32xf32>
    %7 = arith.maximumf %5, %6 : vector<32x32xf32>
    %c0_6 = arith.constant 0 : index
    %c0_7 = arith.constant 0 : index
    %8 = vector.load %arg4[%c0_6, %c0_7] : memref<2x32xf32, #tpu.memory_space<vmem>>, vector<2x32xf32>
    %cst_8 = arith.constant dense<0.000000e+00> : vector<2x32xf32>
    %9 = tpu.matmul %8, %7, %cst_8 {dimension_numbers = #tpu.dot_dimension_numbers<[1], [0], [0], [1], [0, 0, 1, 1], [], []>} : vector<2x32xf32>, vector<32x32xf32>, vector<2x32xf32> -> vector<2x32xf32>
    %c0_9 = arith.constant 0 : index
    %c0_10 = arith.constant 0 : index
    %10 = vector.load %arg5[%c0_9, %c0_10] : memref<2x1xf32, #tpu.memory_space<vmem>>, vector<2x1xf32>
    %11 = vector.broadcast %10 : vector<2x1xf32> to vector<2x32xf32>
    %12 = arith.addf %9, %11 : vector<2x32xf32>
    %13 = tpu.iota {dimensions = array<i32: 1>} : vector<1x32xi32>
    %c32_i32 = arith.constant 32 : i32
    %14 = arith.muli %arg0, %c32_i32 : i32
    %15 = vector.broadcast %14 : i32 to vector<1x32xi32>
    %16 = arith.addi %15, %13 : vector<1x32xi32>
    %c32_i32_11 = arith.constant 32 : i32
    %17 = vector.broadcast %c32_i32_11 : i32 to vector<1x32xi32>
    %18 = arith.cmpi slt, %16, %17 : vector<1x32xi32>
    %cst_12 = arith.constant 0.000000e+00 : f32
    %19 = vector.shape_cast %18 : vector<1x32xi1> to vector<1x32xi1>
    %20 = vector.broadcast %19 : vector<1x32xi1> to vector<2x32xi1>
    %21 = vector.broadcast %cst_12 : f32 to vector<2x32xf32>
    %22 = arith.select %20, %12, %21 : vector<2x32xi1>, vector<2x32xf32>
    %23 = vector.extract_strided_slice %22 {offsets = [0, 0], sizes = [1, 32], strides = [1, 1]} : vector<2x32xf32> to vector<1x32xf32>
    %24 = vector.extract_strided_slice %22 {offsets = [1, 0], sizes = [1, 32], strides = [1, 1]} : vector<2x32xf32> to vector<1x32xf32>
    %25 = arith.maximumf %23, %24 : vector<1x32xf32>
    %cst_13 = arith.constant 0.000000e+00 : f32
    %26 = vector.broadcast %cst_13 : f32 to vector<1x32xf32>
    %27 = arith.subf %23, %25 : vector<1x32xf32>
    %28 = math.exp %27 : vector<1x32xf32>
    %29 = arith.addf %26, %28 : vector<1x32xf32>
    %30 = arith.subf %24, %25 : vector<1x32xf32>
    %31 = math.exp %30 : vector<1x32xf32>
    %32 = arith.addf %29, %31 : vector<1x32xf32>
    %33 = math.log %32 : vector<1x32xf32>
    %34 = arith.addf %25, %33 : vector<1x32xf32>
    %c2_i32 = arith.constant 2 : i32
    %c0_i32 = arith.constant 0 : i32
    %35 = arith.cmpi eq, %c2_i32, %c0_i32 : i32
    %c1_i32 = arith.constant 1 : i32
    %36 = arith.select %35, %c1_i32, %c2_i32 : i32
    %37 = vector.broadcast %36 : i32 to vector<1x32xi32>
    %38 = arith.remsi %16, %37 : vector<1x32xi32>
    %c0_i32_14 = arith.constant 0 : i32
    %39 = vector.broadcast %c0_i32_14 : i32 to vector<1x32xi32>
    %40 = arith.cmpi ne, %38, %39 : vector<1x32xi32>
    %c0_i32_15 = arith.constant 0 : i32
    %41 = vector.broadcast %c0_i32_15 : i32 to vector<1x32xi32>
    %42 = arith.cmpi slt, %38, %41 : vector<1x32xi32>
    %c0_i32_16 = arith.constant 0 : i32
    %43 = arith.cmpi slt, %36, %c0_i32_16 : i32
    %44 = vector.broadcast %43 : i1 to vector<1x32xi1>
    %45 = vector.broadcast %44 : vector<1x32xi1> to vector<1x32xi1>
    %46 = arith.xori %42, %45 : vector<1x32xi1>
    %47 = arith.andi %46, %40 : vector<1x32xi1>
    %48 = vector.broadcast %36 : i32 to vector<1x32xi32>
    %49 = arith.addi %38, %48 : vector<1x32xi32>
    %50 = arith.select %47, %49, %38 : vector<1x32xi1>, vector<1x32xi32>
    %c1_i32_17 = arith.constant 1 : i32
    %51 = vector.broadcast %c1_i32_17 : i32 to vector<1x32xi32>
    %52 = arith.addi %16, %51 : vector<1x32xi32>
    %c2_i32_18 = arith.constant 2 : i32
    %c0_i32_19 = arith.constant 0 : i32
    %53 = arith.cmpi eq, %c2_i32_18, %c0_i32_19 : i32
    %c1_i32_20 = arith.constant 1 : i32
    %54 = arith.select %53, %c1_i32_20, %c2_i32_18 : i32
    %55 = vector.broadcast %54 : i32 to vector<1x32xi32>
    %56 = arith.remsi %52, %55 : vector<1x32xi32>
    %c0_i32_21 = arith.constant 0 : i32
    %57 = vector.broadcast %c0_i32_21 : i32 to vector<1x32xi32>
    %58 = arith.cmpi ne, %56, %57 : vector<1x32xi32>
    %c0_i32_22 = arith.constant 0 : i32
    %59 = vector.broadcast %c0_i32_22 : i32 to vector<1x32xi32>
    %60 = arith.cmpi slt, %56, %59 : vector<1x32xi32>
    %c0_i32_23 = arith.constant 0 : i32
    %61 = arith.cmpi slt, %54, %c0_i32_23 : i32
    %62 = vector.broadcast %61 : i1 to vector<1x32xi1>
    %63 = vector.broadcast %62 : vector<1x32xi1> to vector<1x32xi1>
    %64 = arith.xori %60, %63 : vector<1x32xi1>
    %65 = arith.andi %64, %58 : vector<1x32xi1>
    %66 = vector.broadcast %54 : i32 to vector<1x32xi32>
    %67 = arith.addi %56, %66 : vector<1x32xi32>
    %68 = arith.select %65, %67, %56 : vector<1x32xi1>, vector<1x32xi32>
    %cst_24 = arith.constant 0.000000e+00 : f32
    %69 = vector.broadcast %cst_24 : f32 to vector<1x32xf32>
    %c0_i32_25 = arith.constant 0 : i32
    %70 = vector.broadcast %c0_i32_25 : i32 to vector<1x32xi32>
    %71 = arith.cmpi eq, %50, %70 : vector<1x32xi32>
    %72 = arith.extui %71 : vector<1x32xi1> to vector<1x32xi32>
    %73 = arith.sitofp %72 : vector<1x32xi32> to vector<1x32xf32>
    %cst_26 = arith.constant 1.000000e+00 : f32
    %74 = vector.broadcast %cst_26 : f32 to vector<1x32xf32>
    %75 = arith.mulf %74, %73 : vector<1x32xf32>
    %c0_i32_27 = arith.constant 0 : i32
    %76 = vector.broadcast %c0_i32_27 : i32 to vector<1x32xi32>
    %77 = arith.cmpi eq, %68, %76 : vector<1x32xi32>
    %78 = arith.extui %77 : vector<1x32xi1> to vector<1x32xi32>
    %79 = arith.sitofp %78 : vector<1x32xi32> to vector<1x32xf32>
    %cst_28 = arith.constant 1.000000e+00 : f32
    %80 = vector.broadcast %cst_28 : f32 to vector<1x32xf32>
    %81 = arith.mulf %80, %79 : vector<1x32xf32>
    %82 = arith.addf %75, %81 : vector<1x32xf32>
    %83 = arith.mulf %82, %23 : vector<1x32xf32>
    %84 = arith.addf %69, %83 : vector<1x32xf32>
    %c1_i32_29 = arith.constant 1 : i32
    %85 = vector.broadcast %c1_i32_29 : i32 to vector<1x32xi32>
    %86 = arith.cmpi eq, %50, %85 : vector<1x32xi32>
    %87 = arith.extui %86 : vector<1x32xi1> to vector<1x32xi32>
    %88 = arith.sitofp %87 : vector<1x32xi32> to vector<1x32xf32>
    %cst_30 = arith.constant 1.000000e+00 : f32
    %89 = vector.broadcast %cst_30 : f32 to vector<1x32xf32>
    %90 = arith.mulf %89, %88 : vector<1x32xf32>
    %c1_i32_31 = arith.constant 1 : i32
    %91 = vector.broadcast %c1_i32_31 : i32 to vector<1x32xi32>
    %92 = arith.cmpi eq, %68, %91 : vector<1x32xi32>
    %93 = arith.extui %92 : vector<1x32xi1> to vector<1x32xi32>
    %94 = arith.sitofp %93 : vector<1x32xi32> to vector<1x32xf32>
    %cst_32 = arith.constant 1.000000e+00 : f32
    %95 = vector.broadcast %cst_32 : f32 to vector<1x32xf32>
    %96 = arith.mulf %95, %94 : vector<1x32xf32>
    %97 = arith.addf %90, %96 : vector<1x32xf32>
    %98 = arith.mulf %97, %24 : vector<1x32xf32>
    %99 = arith.addf %84, %98 : vector<1x32xf32>
    %cst_33 = arith.constant 1.000000e+00 : f32
    %cst_34 = arith.constant 1.000000e+00 : f32
    %100 = arith.addf %cst_33, %cst_34 : f32
    %101 = vector.broadcast %100 : f32 to vector<1x32xf32>
    %102 = arith.mulf %101, %34 : vector<1x32xf32>
    %103 = arith.subf %102, %99 : vector<1x32xf32>
    %cst_35 = arith.constant 0.000000e+00 : f32
    %104 = vector.broadcast %cst_35 : f32 to vector<1x32xf32>
    %105 = arith.select %18, %103, %104 : vector<1x32xi1>, vector<1x32xf32>
    %106 = vector.shape_cast %105 : vector<1x32xf32> to vector<1x1x32xf32>
    %cst_36 = arith.constant dense<0.000000e+00> : vector<1xf32>
    %107 = vector.multi_reduction <add>, %106, %cst_36 [1, 2] : vector<1x1x32xf32> to vector<1xf32>
    %108 = vector.shape_cast %107 : vector<1xf32> to vector<1x1x1xf32>
    %109 = vector.extract %108[0, 0, 0] : f32 from vector<1x1x1xf32>
    %110 = vector.broadcast %109 : f32 to vector<1x8x128xf32>
    %c0_37 = arith.constant 0 : index
    %c0_38 = arith.constant 0 : index
    %c0_39 = arith.constant 0 : index
    %111 = vector.load %arg6[%c0_37, %c0_38, %c0_39] : memref<1x8x128xf32, #tpu.memory_space<vmem>>, vector<1x8x128xf32>
    tpu.vector_store %arg6[%c0_37, %c0_38, %c0_39], %110 {strides = array<i32>} : memref<1x8x128xf32, #tpu.memory_space<vmem>>, vector<1x8x128xf32>,
    return
  }
  func.func @transform_0(%arg0: i32) -> (i32, i32) {
    %c0_i32 = arith.constant 0 : i32
    %c0_i32_0 = arith.constant 0 : i32
    return %arg0, %c0_i32 : i32, i32
  }
  func.func @transform_1(%arg0: i32) -> (i32, i32) {
    %c0_i32 = arith.constant 0 : i32
    %c0_i32_0 = arith.constant 0 : i32
    %c0_i32_1 = arith.constant 0 : i32
    return %c0_i32, %c0_i32_0 : i32, i32
  }
  func.func @transform_2(%arg0: i32) -> (i32, i32) {
    %c0_i32 = arith.constant 0 : i32
    %c0_i32_0 = arith.constant 0 : i32
    %c0_i32_1 = arith.constant 0 : i32
    return %c0_i32, %c0_i32_0 : i32, i32
  }
  func.func @transform_3(%arg0: i32) -> (i32, i32) {
    %c0_i32 = arith.constant 0 : i32
    %c0_i32_0 = arith.constant 0 : i32
    %c0_i32_1 = arith.constant 0 : i32
    return %c0_i32, %c0_i32_0 : i32, i32
  }
  func.func @transform_4(%arg0: i32) -> (i32, i32) {
    %c0_i32 = arith.constant 0 : i32
    %c0_i32_0 = arith.constant 0 : i32
    %c0_i32_1 = arith.constant 0 : i32
    return %c0_i32, %c0_i32_0 : i32, i32
  }
  func.func @transform_5(%arg0: i32) -> (i32, i32, i32) {
    %c0_i32 = arith.constant 0 : i32
    %c0_i32_0 = arith.constant 0 : i32
    %c0_i32_1 = arith.constant 0 : i32
    return %arg0, %c0_i32, %c0_i32_0 : i32, i32, i32
  }
}

</mosaic_0001>

<llo_original>
// kernel: tpu_custom_call.1
$region0: #{tpu_custom_call.1}
  #allocation0 [shape = 'u32[]', space=smem, size = 0x4, offset = 0x4, fixed_abs, tag = 'smem constant byte address 0x4 - core index']
  #allocation1 [shape = 'u32[144,128]{1,0:T(1,128)}', space=vmem, size = 0x12000, scoped, tag = 'internal scratch']
  %s0 = inlined_call_operand.vmem [shape: f32[32,32], index: 0, kind: input, shape index: {}]
  %s1 = inlined_call_operand.hbm [shape: f32[32,32], index: 1, kind: input, shape index: {}]
  %s2 = inlined_call_operand.vmem [shape: f32[32,1], index: 2, kind: input, shape index: {}]
  %s3 = inlined_call_operand.vmem [shape: f32[2,32], index: 3, kind: input, shape index: {}]
  %s4 = inlined_call_operand.vmem [shape: f32[2,1], index: 4, kind: input, shape index: {}]
  %s5 = inlined_call_operand.hbm [shape: f32[1,8,128], index: 5, kind: output, shape index: {}]
  %s6 = sld [smem:[#allocation0]]
  $region34: #{tpu_custom_call.1} parent=0
    _
  %s8 = ssub.s32 1, %s6
  %s9 = scalar_select 0, %s8, %s6
  $region1: #{tpu_custom_call.1} parent=0
    #allocation2 [shape = 'u8[16384]{0}', space=vmem, size = 0x4000, scoped, tag = 'input window, operand 1, single buffered']
    #allocation3 [shape = 's32[1]{0}', space=sflag, size = 0x4, scoped, tag = 'scoped memory for tpu_custom_call.1']
    #allocation4 [shape = 's32[1]{0}', space=sflag, size = 0x4, scoped, tag = 'scoped memory for tpu_custom_call.1']
    #allocation5 [shape = 'u8[4096]{0}', space=vmem, size = 0x1000, scoped, tag = 'output window, operand 0, single buffered']
    %10 = vsyncpa [#allocation3], 0
    %11 = vsyncpa [#allocation4], 0
    // Predicated region
    $region2: #{tpu_custom_call.1} parent=1 // pred_check
      _
    $region3: #{tpu_custom_call.1} parent=1 // pred_check_branch
      %13 = sbr.rel (0) target = $region5
    $region4: #{tpu_custom_call.1} parent=1 // pred_region
      _
    $region5: #{tpu_custom_call.1} parent=1 // pred_fallthru
      _
    // Predicated region
    $region6: #{tpu_custom_call.1} parent=1 // pred_check
      _
    $region7: #{tpu_custom_call.1} parent=1 // pred_check_branch
      %15 = sbr.rel (0) target = $region9
    $region8: #{tpu_custom_call.1} parent=1 // pred_region
      %s17 = ssub.s32 512, 512
      %18 = vsyncadd [#allocation3], %s17
      %s19 = sshll.u32 [#allocation2], 4
      %s20 = int_to_ptr.vmem [resolvable:$true] %s19
      %25 = dma.hbm_to_vmem [thread:$0]  %s1, 512, %s20, [#allocation3], 128, 128, 8
    $region9: #{tpu_custom_call.1} parent=1 // pred_fallthru
      _
    // Predicated region
    $region10: #{tpu_custom_call.1} parent=1 // pred_check
      _
    $region11: #{tpu_custom_call.1} parent=1 // pred_check_branch
      %27 = sbr.rel (0) target = $region13
    $region12: #{tpu_custom_call.1} parent=1 // pred_region
      _
    $region13: #{tpu_custom_call.1} parent=1 // pred_fallthru
      _
    // Predicated region
    $region14: #{tpu_custom_call.1} parent=1 // pred_check
      _
    $region15: #{tpu_custom_call.1} parent=1 // pred_check_branch
      %29 = sbr.rel (0) target = $region17
    $region16: #{tpu_custom_call.1} parent=1 // pred_region
      _
    $region17: #{tpu_custom_call.1} parent=1 // pred_fallthru
      _
    // Predicated region
    $region18: #{tpu_custom_call.1} parent=1 // pred_check
      _
    $region19: #{tpu_custom_call.1} parent=1 // pred_check_branch
      %31 = sbr.rel (0) target = $region21
    $region20: #{tpu_custom_call.1} parent=1 // pred_region
      _
    $region21: #{tpu_custom_call.1} parent=1 // pred_fallthru
      _
    // Predicated region
    $region22: #{tpu_custom_call.1} parent=1 // pred_check
      _
    $region23: #{tpu_custom_call.1} parent=1 // pred_check_branch
      %33 = sbr.rel (0) target = $region25
    $region24: #{tpu_custom_call.1} parent=1 // pred_region
      %34 = dma.done [#allocation3], 512
    $region25: #{tpu_custom_call.1} parent=1 // pred_fallthru
      _
    %v35 = vld [vmem:[%s0] sm:$0xff]
    %v36 = vld [vmem:[%s0 + $0x8] sm:$0xff]
    %v37 = vld [vmem:[%s0 + $0x10] sm:$0xff]
    %v38 = vld [vmem:[%s0 + $0x18] sm:$0xff]
    %v39 = vld [vmem:[#allocation2] sm:$0xff]
    %v40 = vld [vmem:[#allocation2 + $0x8] sm:$0xff]
    %v41 = vld [vmem:[#allocation2 + $0x10] sm:$0xff]
    %v42 = vld [vmem:[#allocation2 + $0x18] sm:$0xff]
    %v43 = vld [vmem:[%s2] sm:$0xff]
    %v44 = vld [vmem:[%s2 + $0x8] sm:$0xff]
    %v45 = vld [vmem:[%s2 + $0x10] sm:$0xff]
    %v46 = vld [vmem:[%s2 + $0x18] sm:$0xff]
    %48 = vset.pattern.permute.xlu0 0
    %49 = vperm.xlu0 %48, %v43
    %v50 = vpop.permute.xlu0 %49
    %53 = vset.pattern.permute.xlu0 0
    %54 = vperm.xlu0 %53, %v44
    %v55 = vpop.permute.xlu0 %54
    %58 = vset.pattern.permute.xlu0 0
    %59 = vperm.xlu0 %58, %v45
    %v60 = vpop.permute.xlu0 %59
    %63 = vset.pattern.permute.xlu0 0
    %64 = vperm.xlu0 %63, %v46
    %v65 = vpop.permute.xlu0 %64
    %vm67 = vcmask 261120
    %v69 = vsel %vm67, %v39, 0
    %v72 = vsel %vm67, %v40, 0
    %v75 = vsel %vm67, %v41, 0
    %v78 = vsel %vm67, %v42, 0
    %v81 = vsel %vm67, %v35, 0
    %v84 = vsel %vm67, %v36, 0
    %v87 = vsel %vm67, %v37, 0
    %v90 = vsel %vm67, %v38, 0
    %92 = vmatprep.subr.mxu0 0.0
    %93 = vmatpush1.xpose.msra.mxu0 0.0
    %94 = vmatprep.subr.mxu0 0.0
    %95 = vmatpush1.xpose.msra.mxu0 0.0
    %96 = vmatprep.subr.mxu0 0.0
    %97 = vmatpush1.xpose.msra.mxu0 0.0
    %98 = vmatprep.subr.mxu0 0.0
    %99 = vmatpush1.xpose.msra.mxu0 0.0
    %100 = vmatprep.subr.mxu0 0.0
    %101 = vmatpush1.xpose.msra.mxu0 0.0
    %102 = vmatprep.subr.mxu0 0.0
    %103 = vmatpush1.xpose.msra.mxu0 0.0
    %104 = vmatprep.subr.mxu0 0.0
    %105 = vmatpush1.xpose.msra.mxu0 0.0
    %106 = vmatprep.subr.mxu0 0.0
    %107 = vmatpush1.xpose.msra.mxu0 0.0
    %108 = vmatprep.subr.mxu0 0.0
    %109 = vmatpush1.xpose.msra.mxu0 0.0
    %110 = vmatprep.subr.mxu0 0.0
    %111 = vmatpush1.xpose.msra.mxu0 0.0
    %112 = vmatprep.subr.mxu0 0.0
    %113 = vmatpush1.xpose.msra.mxu0 0.0
    %114 = vmatprep.subr.mxu0 0.0
    %115 = vmatpush1.xpose.msra.mxu0 0.0
    %116 = vmatprep.subr.mxu0 0.0
    %117 = vmatpush1.xpose.msra.mxu0 %v90
    %118 = vmatprep.subr.mxu0 0.0
    %119 = vmatpush1.xpose.msra.mxu0 %v87
    %120 = vmatprep.subr.mxu0 0.0
    %121 = vmatpush1.xpose.msra.mxu0 %v84
    %122 = vmatprep.subr.mxu0 0.0
    %123 = vmatpush1.xpose.msra.mxu0 %v81
    %124 = vmatprep.subr.mxu0 0.0
    %125 = vmatpush2.xpose.msra.mxu0 0.0
    %126 = vmatprep.subr.mxu0 0.0
    %127 = vmatpush2.xpose.msra.mxu0 0.0
    %128 = vmatprep.subr.mxu0 0.0
    %129 = vmatpush2.xpose.msra.mxu0 0.0
    %130 = vmatprep.subr.mxu0 0.0
    %131 = vmatpush2.xpose.msra.mxu0 0.0
    %132 = vmatprep.subr.mxu0 0.0
    %133 = vmatpush2.xpose.msra.mxu0 0.0
    %134 = vmatprep.subr.mxu0 0.0
    %135 = vmatpush2.xpose.msra.mxu0 0.0
    %136 = vmatprep.subr.mxu0 0.0
    %137 = vmatpush2.xpose.msra.mxu0 0.0
    %138 = vmatprep.subr.mxu0 0.0
    %139 = vmatpush2.xpose.msra.mxu0 0.0
    %140 = vmatprep.subr.mxu0 0.0
    %141 = vmatpush2.xpose.msra.mxu0 0.0
    %142 = vmatprep.subr.mxu0 0.0
    %143 = vmatpush2.xpose.msra.mxu0 0.0
    %144 = vmatprep.subr.mxu0 0.0
    %145 = vmatpush2.xpose.msra.mxu0 0.0
    %146 = vmatprep.subr.mxu0 0.0
    %147 = vmatpush2.xpose.msra.mxu0 0.0
    %148 = vmatprep.subr.mxu0 0.0
    %149 = vmatpush2.xpose.msra.mxu0 0.0
    %150 = vmatprep.subr.mxu0 0.0
    %151 = vmatpush2.xpose.msra.mxu0 0.0
    %152 = vmatprep.subr.mxu0 0.0
    %153 = vmatpush2.xpose.msra.mxu0 0.0
    %154 = vmatprep.subr.mxu0 0.0
    %155 = vmatpush2.xpose.msra.mxu0 0.0
    %156 = vmatprep.mubr.f32.mxu0 0.0
    %157 = vmatmul.mubr.f32.gmra.mxu0 %v69
    %v158 = vpop.f32.mrf.mxu0
    %v159 = vadd.f32 %v50, %v158
    %v160 = vpop.f32.mrf.mxu0
    %161 = vmatprep.mubr.f32.mxu0 0.0
    %162 = vmatmul.mubr.f32.gmra.mxu0 %v72
    %v163 = vpop.f32.mrf.mxu0
    %v164 = vadd.f32 %v55, %v163
    %v165 = vpop.f32.mrf.mxu0
    %166 = vmatprep.mubr.f32.mxu0 0.0
    %167 = vmatmul.mubr.f32.gmra.mxu0 %v75
    %v168 = vpop.f32.mrf.mxu0
    %v169 = vadd.f32 %v60, %v168
    %v170 = vpop.f32.mrf.mxu0
    %171 = vmatprep.mubr.f32.mxu0 0.0
    %172 = vmatmul.mubr.f32.gmra.mxu0 %v78
    %v173 = vpop.f32.mrf.mxu0
    %v174 = vadd.f32 %v65, %v173
    %v175 = vpop.f32.mrf.mxu0
    %176 = vdwg.mxu0
    %v177 = vmax.f32 %v159, 0.0
    %v178 = vmax.f32 %v164, 0.0
    %v179 = vmax.f32 %v169, 0.0
    %v180 = vmax.f32 %v174, 0.0
    %v181 = vld [vmem:[%s3] sm:$0x3]
    %v182 = vld [vmem:[%s4] sm:$0x3]
    %184 = vset.pattern.permute.xlu0 0
    %185 = vperm.xlu0 %184, %v182
    %v186 = vpop.permute.xlu0 %185
    %v189 = vsel %vm67, %v181, 0
    %191 = vmatprep.subr.mxu0 0.0
    %192 = vmatpush1.msra.mxu0 0.0
    %193 = vmatprep.subr.mxu0 0.0
    %194 = vmatpush1.msra.mxu0 0.0
    %195 = vmatprep.subr.mxu0 0.0
    %196 = vmatpush1.msra.mxu0 0.0
    %197 = vmatprep.subr.mxu0 0.0
    %198 = vmatpush1.msra.mxu0 0.0
    %199 = vmatprep.subr.mxu0 0.0
    %200 = vmatpush1.msra.mxu0 0.0
    %201 = vmatprep.subr.mxu0 0.0
    %202 = vmatpush1.msra.mxu0 0.0
    %203 = vmatprep.subr.mxu0 0.0
    %204 = vmatpush1.msra.mxu0 0.0
    %205 = vmatprep.subr.mxu0 0.0
    %206 = vmatpush1.msra.mxu0 0.0
    %207 = vmatprep.subr.mxu0 0.0
    %208 = vmatpush1.msra.mxu0 0.0
    %209 = vmatprep.subr.mxu0 0.0
    %210 = vmatpush1.msra.mxu0 0.0
    %211 = vmatprep.subr.mxu0 0.0
    %212 = vmatpush1.msra.mxu0 0.0
    %213 = vmatprep.subr.mxu0 0.0
    %214 = vmatpush1.msra.mxu0 0.0
    %215 = vmatprep.subr.mxu0 0.0
    %216 = vmatpush1.msra.mxu0 %v180
    %217 = vmatprep.subr.mxu0 0.0
    %218 = vmatpush1.msra.mxu0 %v179
    %219 = vmatprep.subr.mxu0 0.0
    %220 = vmatpush1.msra.mxu0 %v178
    %221 = vmatprep.subr.mxu0 0.0
    %222 = vmatpush1.msra.mxu0 %v177
    %223 = vmatprep.subr.mxu0 0.0
    %224 = vmatpush2.msra.mxu0 0.0
    %225 = vmatprep.subr.mxu0 0.0
    %226 = vmatpush2.msra.mxu0 0.0
    %227 = vmatprep.subr.mxu0 0.0
    %228 = vmatpush2.msra.mxu0 0.0
    %229 = vmatprep.subr.mxu0 0.0
    %230 = vmatpush2.msra.mxu0 0.0
    %231 = vmatprep.subr.mxu0 0.0
    %232 = vmatpush2.msra.mxu0 0.0
    %233 = vmatprep.subr.mxu0 0.0
    %234 = vmatpush2.msra.mxu0 0.0
    %235 = vmatprep.subr.mxu0 0.0
    %236 = vmatpush2.msra.mxu0 0.0
    %237 = vmatprep.subr.mxu0 0.0
    %238 = vmatpush2.msra.mxu0 0.0
    %239 = vmatprep.subr.mxu0 0.0
    %240 = vmatpush2.msra.mxu0 0.0
    %241 = vmatprep.subr.mxu0 0.0
    %242 = vmatpush2.msra.mxu0 0.0
    %243 = vmatprep.subr.mxu0 0.0
    %244 = vmatpush2.msra.mxu0 0.0
    %245 = vmatprep.subr.mxu0 0.0
    %246 = vmatpush2.msra.mxu0 0.0
    %247 = vmatprep.subr.mxu0 0.0
    %248 = vmatpush2.msra.mxu0 0.0
    %249 = vmatprep.subr.mxu0 0.0
    %250 = vmatpush2.msra.mxu0 0.0
    %251 = vmatprep.subr.mxu0 0.0
    %252 = vmatpush2.msra.mxu0 0.0
    %253 = vmatprep.subr.mxu0 0.0
    %254 = vmatpush2.msra.mxu0 0.0
    %255 = vmatprep.mubr.f32.mxu0 0.0
    %256 = vmatmul.mubr.f32.gmra.mxu0 %v189
    %v257 = vpop.f32.mrf.mxu0
    %v258 = vadd.f32 %v186, %v257
    %v259 = vpop.f32.mrf.mxu0
    %260 = vdwg.mxu0
    %v261 = vlaneseq
    %v262 = vand.u32 %v261, 127
    %s263 = smul.u32 0, 32
    %v264 = vstv %s263
    %v265 = vadd.s32 %v264, %v262
    %vm266 = vcmp.lt.s32.totalorder %v265, 32
    %v267 = vsel %vm266, 1, 0
    %vm268 = vcmp.eq.s32.totalorder %v267, 1
    %v269 = vsel %vm268, %v258, 0.0
    %v271 = vrot.slane %v269, 1
    %v273 = vmax.f32 %v269, %v271
    %v274 = vsub.f32 %v269, %v273
    %v275 = vmul.f32 %v274, 1.442695
    %v276 = vpow.pop %v275
    %v277 = vadd.f32 %v276, 0.0
    %v279 = vrot.slane %v273, 7
    %v281 = vsub.f32 %v269, %v279
    %v282 = vmul.f32 %v281, 1.442695
    %v283 = vpow.pop %v282
    %v285 = vrot.slane %v283, 1
    %v287 = vadd.f32 %v277, %v285
    %v288 = vlog2.pop %v287
    %v289 = vmul.f32 %v288, 0.6931472
    %v290 = vadd.f32 %v273, %v289
    %vm291 = vcmp.lt.s32.totalorder %v265, 0
    %v292 = vsub.s32 0, %v265
    %v293 = vsel %vm291, %v292, %v265
    %v294 = vshrl.u32 %v293, 1
    %v295 = vand.u32 %v293, 1
    %v296 = vsub.s32 0, %v295
    %v297 = vsel %vm291, %v296, %v295
    %vm298 = vcmp.ne.s32.totalorder %v297, 0
    %vm299 = vcmp.lt.s32.totalorder %v297, 0
    %vm300 = vmand %vm299, %vm298
    %v301 = vadd.s32 %v297, 2
    %v302 = vsel %vm300, %v301, %v297
    %v303 = vadd.s32 %v265, 1
    %vm304 = vcmp.lt.s32.totalorder %v303, 0
    %v305 = vsub.s32 0, %v303
    %v306 = vsel %vm304, %v305, %v303
    %v307 = vshrl.u32 %v306, 1
    %v308 = vand.u32 %v306, 1
    %v309 = vsub.s32 0, %v308
    %v310 = vsel %vm304, %v309, %v308
    %vm311 = vcmp.ne.s32.totalorder %v310, 0
    %vm312 = vcmp.lt.s32.totalorder %v310, 0
    %vm313 = vmand %vm312, %vm311
    %v314 = vadd.s32 %v310, 2
    %v315 = vsel %vm313, %v314, %v310
    %vm316 = vcmp.eq.s32.totalorder %v302, 0
    %v317 = vsel %vm316, 1, 0
    %v318 = vcvt.s32.f32 %v317
    %vm319 = vcmp.eq.s32.totalorder %v315, 0
    %v320 = vsel %vm319, 1, 0
    %v321 = vcvt.s32.f32 %v320
    %v322 = vadd.f32 %v318, %v321
    %v323 = vmul.f32 %v322, %v269
    %v324 = vadd.f32 %v323, 0.0
    %vm325 = vcmp.eq.s32.totalorder %v302, 1
    %v326 = vsel %vm325, 1, 0
    %v327 = vcvt.s32.f32 %v326
    %vm328 = vcmp.eq.s32.totalorder %v315, 1
    %v329 = vsel %vm328, 1, 0
    %v330 = vcvt.s32.f32 %v329
    %v331 = vadd.f32 %v327, %v330
    %v332 = vmul.f32 %v331, %v269
    %v334 = vrot.slane %v332, 1
    %v336 = vadd.f32 %v324, %v334
    %v337 = vmul.f32 %v290, 2.0
    %v338 = vsub.f32 %v337, %v336
    %v339 = vsel %vm266, %v338, 0.0
    %vm340 = vcmask 253952
    %v341 = vsel %vm340, %v339, 0.0
    %342 = vadd.xlane.f32.xlu0 %v341
    %v343 = vpop.xlane.xlu0 %342
    %v344 = vrot.slane %v343, 4
    %v345 = vadd.f32 %v343, %v344
    %v346 = vrot.slane %v345, 2
    %v347 = vadd.f32 %v345, %v346
    %v348 = vrot.slane %v347, 1
    %v349 = vadd.f32 %v347, %v348
    %s350 = vtos %v349
    %v351 = vstv %s350
    %352 = vst [vmem:[#allocation5] sm:$0xff] %v351
    // Predicated region
    $region26: #{tpu_custom_call.1} parent=1 // pred_check
      _
    $region27: #{tpu_custom_call.1} parent=1 // pred_check_branch
      %354 = sbr.rel (0) target = $region29
    $region28: #{tpu_custom_call.1} parent=1 // pred_region
      %s356 = ssub.s32 128, 128
      %357 = vsyncadd [#allocation4], %s356
      %s359 = sshll.u32 [#allocation5], 4
      %s360 = int_to_ptr.vmem [resolvable:$true] %s359
      %362 = dma.vmem_to_hbm [thread:$0]  %s360, 128, %s5, [#allocation4]
    $region29: #{tpu_custom_call.1} parent=1 // pred_fallthru
      _
    // Predicated region
    $region30: #{tpu_custom_call.1} parent=1 // pred_check
      _
    $region31: #{tpu_custom_call.1} parent=1 // pred_check_branch
      %364 = sbr.rel (0) target = $region33
    $region32: #{tpu_custom_call.1} parent=1 // pred_region
      %365 = dma.done [#allocation4], 128
    $region33: #{tpu_custom_call.1} parent=1 // pred_fallthru
      _
    %366 = vsyncpa [#allocation3], 1
    %367 = vsyncpa [#allocation4], 1

</llo_original>
